<compile_context>
chip_gen: v5e
topology: v5e:2x2
jax: 0.10.0
libtpu: 0.0.40
codegen_flags: <defaults>
</compile_context>

<pallas_src>
import math

import jax
import jax.numpy as jnp
from jax import lax
from jax.experimental import pallas as pl
from jax.experimental.pallas import tpu as pltpu


def _make_attn_kernel(has_mask):
    # Contract the last dims of both operands: qh @ kh.T without materializing
    # a transposed copy of kh in VMEM.
    nt_dims = (((1,), (1,)), ((), ()))

    def kernel(*refs):
        if has_mask:
            q_ref, k_ref, v_ref, mask_ref, wo_ref, bo_ref, o_ref, acc_ref = refs
        else:
            q_ref, k_ref, v_ref, wo_ref, bo_ref, o_ref, acc_ref = refs
            mask_ref = None

        h = pl.program_id(2)

        @pl.when(h == 0)
        def _():
            acc_ref[...] = jnp.zeros_like(acc_ref)

        qh = q_ref[0, 0]          # (Tt, dh) bf16, already scaled by 1/sqrt(dh)
        kh = k_ref[0, 0]          # (S,  dh) bf16
        vh = v_ref[0, 0]          # (S,  dh) bf16

        s = lax.dot_general(qh, kh, nt_dims,
                            preferred_element_type=jnp.float32)        # (Tt, S)
        if mask_ref is not None:
            s = s + mask_ref[...].astype(jnp.float32)

        m = jnp.max(s, axis=-1, keepdims=True)
        p = jnp.exp(s - m)
        inv_l = pl.reciprocal(jnp.sum(p, axis=-1, keepdims=True), approx=True)

        oh = jnp.dot(p.astype(jnp.bfloat16), vh,
                     preferred_element_type=jnp.float32) * inv_l        # (Tt, dh)

        # Fused output projection, accumulated per head into f32 VMEM scratch
        # (replaces concat + one (T,E)x(E,E) matmul at the end).
        acc_ref[...] += jnp.dot(oh.astype(jnp.bfloat16), wo_ref[0],
                                preferred_element_type=jnp.float32)     # (Tt, E)

        @pl.when(h == pl.num_programs(2) - 1)
        def _():
            o_ref[...] = (acc_ref[...] + bo_ref[...])[None].astype(o_ref.dtype)

    return kernel


def multi_head_attention(q, k, v, params, *, n_head, mask=None):
    """q: (N, T, E), k/v: (N, S, E) -> (N, T, E)."""
    N, T, E = q.shape
    _, S, _ = k.shape
    assert E % n_head == 0
    d_head = E // n_head

    wq, bq, wk, bk, wv, bv, wo, bo = params
    scale = 1.0 / math.sqrt(d_head)

    # --- one-time prep in XLA (lane-dense full-E GEMMs, head-major reshapes) --
    # The 1/sqrt(d_head) scale is folded into the Q projection.
    qp = (q @ wq.T + bq) * scale
    kp = k @ wk.T + bk
    vp = v @ wv.T + bv

    def to_heads(x):  # (N, L, E) -> (N, H, L, dh) bf16
        n_, L, _ = x.shape
        return jnp.transpose(x.reshape(n_, L, n_head, d_head),
                             (0, 2, 1, 3)).astype(jnp.bfloat16)

    q_h, k_h, v_h = to_heads(qp), to_heads(kp), to_heads(vp)

    # Output projection, head-major: out = sum_h oh[h] @ wo.T[h*dh:(h+1)*dh] + bo
    wo_h = wo.T.reshape(n_head, d_head, E).astype(jnp.bfloat16)
    bo_r = bo.reshape(1, E).astype(jnp.float32)

    # --- query tiling (pad the tail instead of collapsing to one huge block) --
    if T <= 128:
        t_tile = T
    else:
        t_tile = 256 if T % 256 == 0 else 128
    T_pad = pl.cdiv(T, t_tile) * t_tile
    if T_pad != T:
        q_h = jnp.pad(q_h, ((0, 0), (0, 0), (0, T_pad - T), (0, 0)))

    has_mask = mask is not None
    if has_mask:
        # TODO(synk): batch_dot_product_attention's mask convention is not shown
        # in the source; an additive (T, S) float mask is assumed here.
        mask_in = mask.astype(jnp.bfloat16)
        if T_pad != T:
            mask_in = jnp.pad(mask_in, ((0, T_pad - T), (0, 0)))

    grid = (N, T_pad // t_tile, n_head)

    in_specs = [
        pl.BlockSpec((1, 1, t_tile, d_head), lambda n, t, h: (n, h, t, 0)),  # q heads
        pl.BlockSpec((1, 1, S, d_head), lambda n, t, h: (n, h, 0, 0)),       # k heads
        pl.BlockSpec((1, 1, S, d_head), lambda n, t, h: (n, h, 0, 0)),       # v heads
    ]
    inputs = [q_h, k_h, v_h]
    if has_mask:
        in_specs.append(pl.BlockSpec((t_tile, S), lambda n, t, h: (t, 0)))
        inputs.append(mask_in)
    in_specs += [
        pl.BlockSpec((1, d_head, E), lambda n, t, h: (h, 0, 0)),             # wout slab
        pl.BlockSpec((1, E), lambda n, t, h: (0, 0)),                        # bout
    ]
    inputs += [wo_h, bo_r]

    # VMEM budget: per-head blocks are small; cap at 32 MiB which is safe on
    # every generation (v7x has 64 MiB physical, v5e/v6e have 128 MiB).
    bf16 = 2
    est = (2 * (t_tile * d_head + 2 * S * d_head + d_head * E) * bf16
           + (2 * t_tile * S * bf16 if has_mask else 0)
           + 2 * E * 4
           + 2 * t_tile * E * q.dtype.itemsize
           + t_tile * E * 4)
    vmem_limit = int(min(max(4 * est, 8 * 1024 * 1024), 32 * 1024 * 1024))

    out = pl.pallas_call(
        _make_attn_kernel(has_mask),
        out_shape=jax.ShapeDtypeStruct((N, T_pad, E), q.dtype),
        grid=grid,
        in_specs=in_specs,
        out_specs=pl.BlockSpec((1, t_tile, E), lambda n, t, h: (n, t, 0)),
        scratch_shapes=[pltpu.VMEM((t_tile, E), jnp.float32)],
        compiler_params=pltpu.CompilerParams(
            dimension_semantics=("parallel", "parallel", "arbitrary"),
            vmem_limit_bytes=vmem_limit),
    )(*inputs)

    return out[:, :T, :] if T_pad != T else out


def _reference(q, k, v, params, *, n_head, mask=None):
    """Pure-JAX (f32) reference mirroring the PyTorch forward."""
    wq, bq, wk, bk, wv, bv, wo, bo = params
    E = q.shape[-1]
    d_head = E // n_head
    qp = q @ wq.T + bq
    kp = k @ wk.T + bk
    vp = v @ wv.T + bv
    qs = jnp.stack(jnp.split(qp, n_head, axis=-1))   # (H, N, T, dh)
    ks = jnp.stack(jnp.split(kp, n_head, axis=-1))
    vs = jnp.stack(jnp.split(vp, n_head, axis=-1))
    s = jnp.einsum("hntd,hnsd->hnts", qs, ks) / math.sqrt(d_head)
    if mask is not None:
        s = s + mask
    p = jax.nn.softmax(s, axis=-1)
    out = jnp.einsum("hnts,hnsd->hntd", p, vs)
    out = jnp.concatenate(list(out), axis=-1)        # cat(unbind(0), dim=-1)
    return out @ wo.T + bo


if __name__ == "__main__":
    N, T, S = 2, 8, 8
    d_model, n_head = 32, 4

    key = jax.random.PRNGKey(0)
    keys = jax.random.split(key, 11)

    q = jax.random.normal(keys[0], (N, T, d_model), jnp.float32)
    k = jax.random.normal(keys[1], (N, S, d_model), jnp.float32)
    v = jax.random.normal(keys[2], (N, S, d_model), jnp.float32)

    bound = 1.0 / math.sqrt(d_model)  # nn.Linear default init range
    def lin(kw, kb):
        w = jax.random.uniform(kw, (d_model, d_model), jnp.float32, -bound, bound)
        b = jax.random.uniform(kb, (d_model,), jnp.float32, -bound, bound)
        return w, b

    wq, bq = lin(keys[3], keys[4])
    wk, bk = lin(keys[5], keys[6])
    wv, bv = lin(keys[7], keys[8])
    wo, bo = lin(keys[9], keys[10])
    params = (wq, bq, wk, bk, wv, bv, wo, bo)

    # No-mask path.
    out = multi_head_attention(q, k, v, params, n_head=n_head, mask=None)
    out = jax.block_until_ready(out)
    ref = _reference(q, k, v, params, n_head=n_head, mask=None)
    assert out.shape == (N, T, d_model)
    assert jnp.allclose(out, ref, atol=5e-2, rtol=5e-2), "mismatch vs reference (no mask)"

    # Additive (causal) mask path.
    causal = jnp.where(jnp.tril(jnp.ones((T, S), bool)), 0.0, -1e9).astype(jnp.float32)
    out_m = multi_head_attention(q, k, v, params, n_head=n_head, mask=causal)
    out_m = jax.block_until_ready(out_m)
    ref_m = _reference(q, k, v, params, n_head=n_head, mask=causal)
    assert jnp.allclose(out_m, ref_m, atol=5e-2, rtol=5e-2), "mismatch vs reference (mask)"

    print("KERNEL_OK")
</pallas_src>

<mosaic_0001>
module attributes {stable_mosaic.version = 11 : i64} {
  func.func @kernel(%arg0: i32, %arg1: i32, %arg2: i32, %arg3: memref<1x1x8x8xbf16, #tpu.memory_space<vmem>>, %arg4: memref<1x1x8x8xbf16, #tpu.memory_space<vmem>>, %arg5: memref<1x1x8x8xbf16, #tpu.memory_space<vmem>>, %arg6: memref<1x8x32xbf16, #tpu.memory_space<vmem>>, %arg7: memref<1x32xf32, #tpu.memory_space<vmem>>, %arg8: memref<1x8x32xf32, #tpu.memory_space<vmem>>, %arg9: memref<8x32xf32, #tpu.memory_space<vmem>>) attributes {dimension_semantics = [#tpu.dimension_semantics<parallel>, #tpu.dimension_semantics<parallel>, #tpu.dimension_semantics<arbitrary>], iteration_bounds = array<i64: 2, 1, 4>, scalar_prefetch = 0 : i64, scratch_operands = 1 : i64, tpu.core_type = #tpu.core_type<tc>, window_params = [{transform_indices = @transform_0, window_bounds = array<i64: 1, 1, 8, 8>}, {transform_indices = @transform_1, window_bounds = array<i64: 1, 1, 8, 8>}, {transform_indices = @transform_2, window_bounds = array<i64: 1, 1, 8, 8>}, {transform_indices = @transform_3, window_bounds = array<i64: 1, 8, 32>}, {pipeline_mode = #tpu.pipeline_mode<synchronous>, transform_indices = @transform_4, window_bounds = array<i64: 1, 32>}, {transform_indices = @transform_5, window_bounds = array<i64: 1, 8, 32>}]} {
    %c0_i32 = arith.constant 0 : i32
    %0 = arith.cmpi eq, %arg2, %c0_i32 : i32
    %1 = arith.extui %0 : i1 to i32
    %c0_i32_0 = arith.constant 0 : i32
    %2 = arith.cmpi ne, %1, %c0_i32_0 : i32
    scf.if %2 {
      %cst_24 = arith.constant 0.000000e+00 : f32
      %32 = vector.broadcast %cst_24 : f32 to vector<8x32xf32>
      %c0_25 = arith.constant 0 : index
      %c0_26 = arith.constant 0 : index
      %33 = vector.load %arg9[%c0_25, %c0_26] : memref<8x32xf32, #tpu.memory_space<vmem>>, vector<8x32xf32>
      tpu.vector_store %arg9[%c0_25, %c0_26], %32 {strides = array<i32>} : memref<8x32xf32, #tpu.memory_space<vmem>>, vector<8x32xf32>,
    } else {
    }
    %c0 = arith.constant 0 : index
    %c0_1 = arith.constant 0 : index
    %c0_2 = arith.constant 0 : index
    %c0_3 = arith.constant 0 : index
    %3 = vector.load %arg3[%c0, %c0_1, %c0_2, %c0_3] : memref<1x1x8x8xbf16, #tpu.memory_space<vmem>>, vector<1x1x8x8xbf16>
    %4 = vector.shape_cast %3 : vector<1x1x8x8xbf16> to vector<8x8xbf16>
    %c0_4 = arith.constant 0 : index
    %c0_5 = arith.constant 0 : index
    %c0_6 = arith.constant 0 : index
    %c0_7 = arith.constant 0 : index
    %5 = vector.load %arg4[%c0_4, %c0_5, %c0_6, %c0_7] : memref<1x1x8x8xbf16, #tpu.memory_space<vmem>>, vector<1x1x8x8xbf16>
    %6 = vector.shape_cast %5 : vector<1x1x8x8xbf16> to vector<8x8xbf16>
    %c0_8 = arith.constant 0 : index
    %c0_9 = arith.constant 0 : index
    %c0_10 = arith.constant 0 : index
    %c0_11 = arith.constant 0 : index
    %7 = vector.load %arg5[%c0_8, %c0_9, %c0_10, %c0_11] : memref<1x1x8x8xbf16, #tpu.memory_space<vmem>>, vector<1x1x8x8xbf16>
    %8 = vector.shape_cast %7 : vector<1x1x8x8xbf16> to vector<8x8xbf16>
    %cst = arith.constant dense<0.000000e+00> : vector<8x8xf32>
    %9 = tpu.matmul %4, %6, %cst {dimension_numbers = #tpu.dot_dimension_numbers<[1], [1], [0], [0], [0, 0, 1, 0], [], []>} : vector<8x8xbf16>, vector<8x8xbf16>, vector<8x8xf32> -> vector<8x8xf32>
    %cst_12 = arith.constant dense<0xFF800000> : vector<8xf32>
    %10 = vector.multi_reduction <maximumf>, %9, %cst_12 [1] : vector<8x8xf32> to vector<8xf32>
    %11 = vector.shape_cast %10 : vector<8xf32> to vector<8x1xf32>
    %12 = vector.broadcast %11 : vector<8x1xf32> to vector<8x8xf32>
    %13 = arith.subf %9, %12 : vector<8x8xf32>
    %14 = math.exp %13 : vector<8x8xf32>
    %cst_13 = arith.constant dense<0.000000e+00> : vector<8xf32>
    %15 = vector.multi_reduction <add>, %14, %cst_13 [1] : vector<8x8xf32> to vector<8xf32>
    %16 = vector.shape_cast %15 : vector<8xf32> to vector<8x1xf32>
    %17 = tpu.reciprocal %16 {approx = true} : vector<8x1xf32> -> vector<8x1xf32>
    %18 = arith.truncf %14 : vector<8x8xf32> to vector<8x8xbf16>
    %cst_14 = arith.constant dense<0.000000e+00> : vector<8x8xf32>
    %19 = tpu.matmul %18, %8, %cst_14 {dimension_numbers = #tpu.dot_dimension_numbers<[1], [0], [0], [1], [0, 0, 1, 1], [], []>} : vector<8x8xbf16>, vector<8x8xbf16>, vector<8x8xf32> -> vector<8x8xf32>
    %20 = vector.broadcast %17 : vector<8x1xf32> to vector<8x8xf32>
    %21 = arith.mulf %19, %20 : vector<8x8xf32>
    %c0_15 = arith.constant 0 : index
    %c0_16 = arith.constant 0 : index
    %22 = vector.load %arg9[%c0_15, %c0_16] : memref<8x32xf32, #tpu.memory_space<vmem>>, vector<8x32xf32>
    %23 = arith.truncf %21 : vector<8x8xf32> to vector<8x8xbf16>
    %c0_17 = arith.constant 0 : index
    %c0_18 = arith.constant 0 : index
    %c0_19 = arith.constant 0 : index
    %24 = vector.load %arg6[%c0_17, %c0_18, %c0_19] : memref<1x8x32xbf16, #tpu.memory_space<vmem>>, vector<1x8x32xbf16>
    %25 = vector.shape_cast %24 : vector<1x8x32xbf16> to vector<8x32xbf16>
    %cst_20 = arith.constant dense<0.000000e+00> : vector<8x32xf32>
    %26 = tpu.matmul %23, %25, %cst_20 {dimension_numbers = #tpu.dot_dimension_numbers<[1], [0], [0], [1], [0, 0, 1, 1], [], []>} : vector<8x8xbf16>, vector<8x32xbf16>, vector<8x32xf32> -> vector<8x32xf32>
    %27 = arith.addf %22, %26 : vector<8x32xf32>
    %c0_21 = arith.constant 0 : index
    %c0_22 = arith.constant 0 : index
    %28 = vector.load %arg9[%c0_21, %c0_22] : memref<8x32xf32, #tpu.memory_space<vmem>>, vector<8x32xf32>
    tpu.vector_store %arg9[%c0_21, %c0_22], %27 {strides = array<i32>} : memref<8x32xf32, #tpu.memory_space<vmem>>, vector<8x32xf32>,
    %c3_i32 = arith.constant 3 : i32
    %29 = arith.cmpi eq, %arg2, %c3_i32 : i32
    %30 = arith.extui %29 : i1 to i32
    %c0_i32_23 = arith.constant 0 : i32
    %31 = arith.cmpi ne, %30, %c0_i32_23 : i32
    scf.if %31 {
      %c0_24 = arith.constant 0 : index
      %c0_25 = arith.constant 0 : index
      %32 = vector.load %arg9[%c0_24, %c0_25] : memref<8x32xf32, #tpu.memory_space<vmem>>, vector<8x32xf32>
      %c0_26 = arith.constant 0 : index
      %c0_27 = arith.constant 0 : index
      %33 = vector.load %arg7[%c0_26, %c0_27] : memref<1x32xf32, #tpu.memory_space<vmem>>, vector<1x32xf32>
      %34 = vector.broadcast %33 : vector<1x32xf32> to vector<8x32xf32>
      %35 = arith.addf %32, %34 : vector<8x32xf32>
      %36 = vector.shape_cast %35 : vector<8x32xf32> to vector<1x8x32xf32>
      %c0_28 = arith.constant 0 : index
      %c0_29 = arith.constant 0 : index
      %c0_30 = arith.constant 0 : index
      %37 = vector.load %arg8[%c0_28, %c0_29, %c0_30] : memref<1x8x32xf32, #tpu.memory_space<vmem>>, vector<1x8x32xf32>
      tpu.vector_store %arg8[%c0_28, %c0_29, %c0_30], %36 {strides = array<i32>} : memref<1x8x32xf32, #tpu.memory_space<vmem>>, vector<1x8x32xf32>,
    } else {
    }
    return
  }
  func.func @transform_0(%arg0: i32, %arg1: i32, %arg2: i32) -> (i32, i32, i32, i32) {
    %c0_i32 = arith.constant 0 : i32
    %c0_i32_0 = arith.constant 0 : i32
    return %arg0, %arg2, %arg1, %c0_i32 : i32, i32, i32, i32
  }
  func.func @transform_1(%arg0: i32, %arg1: i32, %arg2: i32) -> (i32, i32, i32, i32) {
    %c0_i32 = arith.constant 0 : i32
    %c0_i32_0 = arith.constant 0 : i32
    %c0_i32_1 = arith.constant 0 : i32
    return %arg0, %arg2, %c0_i32, %c0_i32_0 : i32, i32, i32, i32
  }
  func.func @transform_2(%arg0: i32, %arg1: i32, %arg2: i32) -> (i32, i32, i32, i32) {
    %c0_i32 = arith.constant 0 : i32
    %c0_i32_0 = arith.constant 0 : i32
    %c0_i32_1 = arith.constant 0 : i32
    return %arg0, %arg2, %c0_i32, %c0_i32_0 : i32, i32, i32, i32
  }
  func.func @transform_3(%arg0: i32, %arg1: i32, %arg2: i32) -> (i32, i32, i32) {
    %c0_i32 = arith.constant 0 : i32
    %c0_i32_0 = arith.constant 0 : i32
    %c0_i32_1 = arith.constant 0 : i32
    return %arg2, %c0_i32, %c0_i32_0 : i32, i32, i32
  }
  func.func @transform_4(%arg0: i32, %arg1: i32, %arg2: i32) -> (i32, i32) {
    %c0_i32 = arith.constant 0 : i32
    %c0_i32_0 = arith.constant 0 : i32
    %c0_i32_1 = arith.constant 0 : i32
    return %c0_i32, %c0_i32_0 : i32, i32
  }
  func.func @transform_5(%arg0: i32, %arg1: i32, %arg2: i32) -> (i32, i32, i32) {
    %c0_i32 = arith.constant 0 : i32
    %c0_i32_0 = arith.constant 0 : i32
    return %arg0, %arg1, %c0_i32 : i32, i32, i32
  }
}

</mosaic_0001>

<llo_original>
// kernel: tpu_custom_call.1
$region0: #{tpu_custom_call.1}
  #allocation0 [shape = 'u32[]', space=smem, size = 0x4, offset = 0x4, fixed_abs, tag = 'smem constant byte address 0x4 - core index']
  #allocation1 [shape = 'u32[72,128]{1,0:T(1,128)}', space=vmem, size = 0x9000, scoped, tag = 'internal scratch']
  #allocation2 [shape = 'f32[8,32]{1,0:T(8,128)}', space=vmem, size = 0x1000, scoped, tag = 'scratch operand']
  %s0 = inlined_call_operand.hbm [shape: bf16[2,4,8,8], index: 0, kind: input, shape index: {}]
  %s1 = inlined_call_operand.hbm [shape: bf16[2,4,8,8], index: 1, kind: input, shape index: {}]
  %s2 = inlined_call_operand.hbm [shape: bf16[2,4,8,8], index: 2, kind: input, shape index: {}]
  %s3 = inlined_call_operand.hbm [shape: bf16[4,8,32], index: 3, kind: input, shape index: {}]
  %s4 = inlined_call_operand.vmem [shape: f32[1,32], index: 4, kind: input, shape index: {}]
  %s5 = inlined_call_operand.hbm [shape: f32[2,8,32], index: 5, kind: output, shape index: {}]
  %s6 = sld [smem:[#allocation0]]
  $region77: #{tpu_custom_call.1} parent=0
    _
  %s8 = ssub.s32 1, %s6
  %s9 = scalar_select 0, %s8, %s6
  $region1: #{tpu_custom_call.1} parent=0
    #allocation3 [shape = 'u8[4096]{0}', space=vmem, size = 0x1000, scoped, tag = 'input window, operand 0']
    #allocation4 [shape = 's32[2]{0}', space=sflag, size = 0x8, scoped, tag = 'scoped memory for tpu_custom_call.1']
    #allocation5 [shape = 's32[2]{0}', space=sflag, size = 0x8, scoped, tag = 'scoped memory for tpu_custom_call.1']
    #allocation6 [shape = 'u8[4096]{0}', space=vmem, size = 0x1000, scoped, tag = 'input window, operand 1']
    #allocation7 [shape = 's32[2]{0}', space=sflag, size = 0x8, scoped, tag = 'scoped memory for tpu_custom_call.1']
    #allocation8 [shape = 'u8[4096]{0}', space=vmem, size = 0x1000, scoped, tag = 'input window, operand 2']
    #allocation9 [shape = 'u8[4096]{0}', space=vmem, size = 0x1000, scoped, tag = 'input window, operand 3']
    #allocation10 [shape = 's32[2]{0}', space=sflag, size = 0x8, scoped, tag = 'scoped memory for tpu_custom_call.1']
    #allocation11 [shape = 'u8[8192]{0}', space=vmem, size = 0x2000, scoped, tag = 'output window, operand 0']
    %10 = vsyncpa [#allocation4], 0
    %s11 = scalar_lea.sflag [#allocation4], 1
    %12 = vsyncpa %s11, 0
    %13 = vsyncpa [#allocation7], 0
    %s14 = scalar_lea.sflag [#allocation7], 1
    %15 = vsyncpa %s14, 0
    %16 = vsyncpa [#allocation10], 0
    %s17 = scalar_lea.sflag [#allocation10], 1
    %18 = vsyncpa %s17, 0
    %19 = vsyncpa [#allocation5], 0
    %s20 = scalar_lea.sflag [#allocation5], 1
    %21 = vsyncpa %s20, 0
    loop: start=0, step=1, limit=10
    $region2: #{tpu_custom_call.1} parent=1 // loop_pre_header
      _
    $region3: #{tpu_custom_call.1} parent=1 // loop_header
      %s23 = sphi 0, %s27
      %p24 = scmp.ge.s32.totalorder %s23, 10
      %s30 = sphi 0, %s49
      %s31 = sphi 0, %s45
      %s32 = sphi 0, %s41
      %s33 = sphi 0, %s30
      %s34 = sphi 0, %s31
      %s35 = sphi 0, %s32
      %s36 = sphi 0, %s33
      %s37 = sphi 0, %s34
      %s38 = sphi 0, %s35
      %s56 = sphi 0, %s58
      %s59 = sphi 0, %s56
      %s60 = sphi 0, %s59
      %s76 = sphi 0, %s60
      %s84 = sphi 0, %s86
      %s87 = sphi 0, %s84
      %s88 = sphi 0, %s87
      %s104 = sphi 0, %s88
      %s112 = sphi 0, %s114
      %s115 = sphi 0, %s112
      %s116 = sphi 0, %s115
      %s132 = sphi 0, %s116
      %s138 = sphi 0, %s140
      %s141 = sphi 0, %s138
      %s142 = sphi 0, %s141
      %s158 = sphi 0, %s142
      %s162 = sphi 0, %s162
      %s164 = sphi 0, %s162
      %s165 = sphi 0, %s164
      %s179 = sphi 0, %s165
      %s187 = sphi 0, %s189
      %s190 = sphi 0, %s187
      %s191 = sphi 0, %s190
      %s207 = sphi 0, %s191
    $region4: #{tpu_custom_call.1} parent=1 // loop_header_branch
      %26 = sbr.rel (%p24) target = $region8
    $region5: #{tpu_custom_call.1} parent=1 // loop_body
      %s28 = ssub.s32 %s23, 1
      %s29 = ssub.s32 %s23, 2
      %s39 = sadd.s32 1, %s32
      %p40 = scmp.ge.s32.totalorder %s39, 4
      %s41 = scalar_select %p40, 0, %s39
      %s42 = sadd.s32 1, %s31
      %s43 = scalar_select %p40, %s42, %s31
      %p44 = scmp.ge.s32.totalorder %s43, 1
      %s45 = scalar_select %p44, 0, %s43
      %s46 = sadd.s32 1, %s30
      %s47 = scalar_select %p44, %s46, %s30
      %p48 = scmp.ge.s32.totalorder %s47, 2
      %s49 = scalar_select %p48, 0, %s47
      %s50 = ssub.s32 %s30, %s49
      %s51 = ssub.s32 %s32, %s41
      %s52 = sor.u32 %s50, %s51
      %s53 = ssub.s32 %s31, %s45
      %s54 = sor.u32 %s52, %s53
      %p55 = scmp.eq.s32.totalorder %s54, 0
      %s57 = sadd.s32 %s56, 1
      %s58 = scalar_select %p55, %s56, %s57
      %p61 = pneg %p55
      %p62 = scmp.eq.s32.totalorder %s23, 7
      %p63 = por %p61, %p62
      %p64 = scmp.ne.s32.totalorder %s56, %s59
      %p65 = scmp.eq.s32.totalorder %s23, 0
      %p66 = por %p64, %p65
      %p67 = scmp.ne.s32.totalorder %s56, %s59
      %p68 = scmp.eq.s32.totalorder %s28, 7
      %p69 = por %p67, %p68
      %p70 = scmp.ne.s32.totalorder %s59, %s60
      %p71 = scmp.eq.s32.totalorder %s28, 0
      %p72 = por %p70, %p71
      %p73 = scmp.ne.s32.totalorder %s59, %s60
      %p74 = scmp.eq.s32.totalorder %s29, 7
      %p75 = por %p73, %p74
      %p77 = scmp.ne.s32.totalorder %s60, %s76
      %p78 = scmp.eq.s32.totalorder %s29, 0
      %p79 = por %p77, %p78
      %s80 = ssub.s32 %s30, %s49
      %s81 = ssub.s32 %s32, %s41
      %s82 = sor.u32 %s80, %s81
      %p83 = scmp.eq.s32.totalorder %s82, 0
      %s85 = sadd.s32 %s84, 1
      %s86 = scalar_select %p83, %s84, %s85
      %p89 = pneg %p83
      %p90 = scmp.eq.s32.totalorder %s23, 7
      %p91 = por %p89, %p90
      %p92 = scmp.ne.s32.totalorder %s84, %s87
      %p93 = scmp.eq.s32.totalorder %s23, 0
      %p94 = por %p92, %p93
      %p95 = scmp.ne.s32.totalorder %s84, %s87
      %p96 = scmp.eq.s32.totalorder %s28, 7
      %p97 = por %p95, %p96
      %p98 = scmp.ne.s32.totalorder %s87, %s88
      %p99 = scmp.eq.s32.totalorder %s28, 0
      %p100 = por %p98, %p99
      %p101 = scmp.ne.s32.totalorder %s87, %s88
      %p102 = scmp.eq.s32.totalorder %s29, 7
      %p103 = por %p101, %p102
      %p105 = scmp.ne.s32.totalorder %s88, %s104
      %p106 = scmp.eq.s32.totalorder %s29, 0
      %p107 = por %p105, %p106
      %s108 = ssub.s32 %s30, %s49
      %s109 = ssub.s32 %s32, %s41
      %s110 = sor.u32 %s108, %s109
      %p111 = scmp.eq.s32.totalorder %s110, 0
      %s113 = sadd.s32 %s112, 1
      %s114 = scalar_select %p111, %s112, %s113
      %p117 = pneg %p111
      %p118 = scmp.eq.s32.totalorder %s23, 7
      %p119 = por %p117, %p118
      %p120 = scmp.ne.s32.totalorder %s112, %s115
      %p121 = scmp.eq.s32.totalorder %s23, 0
      %p122 = por %p120, %p121
      %p123 = scmp.ne.s32.totalorder %s112, %s115
      %p124 = scmp.eq.s32.totalorder %s28, 7
      %p125 = por %p123, %p124
      %p126 = scmp.ne.s32.totalorder %s115, %s116
      %p127 = scmp.eq.s32.totalorder %s28, 0
      %p128 = por %p126, %p127
      %p129 = scmp.ne.s32.totalorder %s115, %s116
      %p130 = scmp.eq.s32.totalorder %s29, 7
      %p131 = por %p129, %p130
      %p133 = scmp.ne.s32.totalorder %s116, %s132
      %p134 = scmp.eq.s32.totalorder %s29, 0
      %p135 = por %p133, %p134
      %s136 = ssub.s32 %s32, %s41
      %p137 = scmp.eq.s32.totalorder %s136, 0
      %s139 = sadd.s32 %s138, 1
      %s140 = scalar_select %p137, %s138, %s139
      %p143 = pneg %p137
      %p144 = scmp.eq.s32.totalorder %s23, 7
      %p145 = por %p143, %p144
      %p146 = scmp.ne.s32.totalorder %s138, %s141
      %p147 = scmp.eq.s32.totalorder %s23, 0
      %p148 = por %p146, %p147
      %p149 = scmp.ne.s32.totalorder %s138, %s141
      %p150 = scmp.eq.s32.totalorder %s28, 7
      %p151 = por %p149, %p150
      %p152 = scmp.ne.s32.totalorder %s141, %s142
      %p153 = scmp.eq.s32.totalorder %s28, 0
      %p154 = por %p152, %p153
      %p155 = scmp.ne.s32.totalorder %s141, %s142
      %p156 = scmp.eq.s32.totalorder %s29, 7
      %p157 = por %p155, %p156
      %p159 = scmp.ne.s32.totalorder %s142, %s158
      %p160 = scmp.eq.s32.totalorder %s29, 0
      %p161 = por %p159, %p160
      %s163 = sadd.s32 %s162, 1
      %p166 = scmp.eq.s32.totalorder %s23, 7
      %p167 = scmp.ne.s32.totalorder %s162, %s164
      %p168 = scmp.eq.s32.totalorder %s23, 0
      %p169 = por %p167, %p168
      %p170 = scmp.ne.s32.totalorder %s162, %s164
      %p171 = scmp.eq.s32.totalorder %s28, 7
      %p172 = por %p170, %p171
      %p173 = scmp.ne.s32.totalorder %s164, %s165
      %p174 = scmp.eq.s32.totalorder %s28, 0
      %p175 = por %p173, %p174
      %p176 = scmp.ne.s32.totalorder %s164, %s165
      %p177 = scmp.eq.s32.totalorder %s29, 7
      %p178 = por %p176, %p177
      %p180 = scmp.ne.s32.totalorder %s165, %s179
      %p181 = scmp.eq.s32.totalorder %s29, 0
      %p182 = por %p180, %p181
      %s183 = ssub.s32 %s30, %s49
      %s184 = ssub.s32 %s31, %s45
      %s185 = sor.u32 %s183, %s184
      %p186 = scmp.eq.s32.totalorder %s185, 0
      %s188 = sadd.s32 %s187, 1
      %s189 = scalar_select %p186, %s187, %s188
      %p192 = pneg %p186
      %p193 = scmp.eq.s32.totalorder %s23, 7
      %p194 = por %p192, %p193
      %p195 = scmp.ne.s32.totalorder %s187, %s190
      %p196 = scmp.eq.s32.totalorder %s23, 0
      %p197 = por %p195, %p196
      %p198 = scmp.ne.s32.totalorder %s187, %s190
      %p199 = scmp.eq.s32.totalorder %s28, 7
      %p200 = por %p198, %p199
      %p201 = scmp.ne.s32.totalorder %s190, %s191
      %p202 = scmp.eq.s32.totalorder %s28, 0
      %p203 = por %p201, %p202
      %p204 = scmp.ne.s32.totalorder %s190, %s191
      %p205 = scmp.eq.s32.totalorder %s29, 7
      %p206 = por %p204, %p205
      %p208 = scmp.ne.s32.totalorder %s191, %s207
      %p209 = scmp.eq.s32.totalorder %s29, 0
      %p210 = por %p208, %p209
      %p211 = scmp.le.s32.totalorder 1, %s23
      %p212 = scmp.lt.s32.totalorder %s23, 9
      %p213 = pnand %p211, %p212
      %p214 = pneg %p213
      // Predicated region
      $region9: #{tpu_custom_call.1} parent=5 // pred_check
        _
      $region10: #{tpu_custom_call.1} parent=5 // pred_check_branch
        %216 = sbr.rel (%p213) target = $region12
      $region11: #{tpu_custom_call.1} parent=5 // pred_region
        %s217 = ssub.s32 %s23, 1
        // Predicated region
        $region13: #{tpu_custom_call.1} parent=11 // pred_check
          %p218 = pneg %p175
        $region14: #{tpu_custom_call.1} parent=11 // pred_check_branch
          %220 = sbr.rel (%p218) target = $region16
        $region15: #{tpu_custom_call.1} parent=11 // pred_region
          _
        $region16: #{tpu_custom_call.1} parent=11 // pred_fallthru
          _
      $region12: #{tpu_custom_call.1} parent=5 // pred_fallthru
        _
      %p221 = scmp.lt.s32.totalorder %s23, 8
      // Predicated region
      $region17: #{tpu_custom_call.1} parent=5 // pred_check
        %p222 = pneg %p221
      $region18: #{tpu_custom_call.1} parent=5 // pred_check_branch
        %224 = sbr.rel (%p222) target = $region20
      $region19: #{tpu_custom_call.1} parent=5 // pred_region
        // Predicated region
        $region21: #{tpu_custom_call.1} parent=19 // pred_check
          %p225 = pneg %p66
        $region22: #{tpu_custom_call.1} parent=19 // pred_check_branch
          %227 = sbr.rel (%p225) target = $region24
        $region23: #{tpu_custom_call.1} parent=19 // pred_region
          %s228 = sand.u32 %s56, 1
          %s229 = scalar_lea.sflag [#allocation4], %s228
          %s230 = sand.u32 %s56, 1
          %s231 = smul.addr %s230, 4
          %s232 = scalar_lea.vmem [#allocation3], %s231
          %234 = vsyncadd %s229, 0
          %s235 = sadd.s32 %s31, %s32
          %s236 = smul.addr %s30, 4
          %s237 = sadd.s32 %s235, %s236
          %s238 = smul.addr %s237, 4
          %s239 = scalar_lea.hbm %s0, %s238
          %s241 = sshll.u32 %s239, 4
          %s242 = int_to_ptr.hbm [resolvable:$true] %s241
          %s243 = sshll.u32 %s232, 4
          %s244 = int_to_ptr.vmem [resolvable:$true] %s243
          %246 = dma.hbm_to_vmem [thread:$0]  %s242, 64, %s244, %s229
        $region24: #{tpu_custom_call.1} parent=19 // pred_fallthru
          _
        // Predicated region
        $region25: #{tpu_custom_call.1} parent=19 // pred_check
          %p247 = pneg %p94
        $region26: #{tpu_custom_call.1} parent=19 // pred_check_branch
          %249 = sbr.rel (%p247) target = $region28
        $region27: #{tpu_custom_call.1} parent=19 // pred_region
          %s250 = sand.u32 %s23, 1
          %s251 = scalar_lea.sflag [#allocation7], %s250
          %s252 = sand.u32 %s84, 1
          %s253 = smul.addr %s252, 4
          %s254 = scalar_lea.vmem [#allocation6], %s253
          %256 = vsyncadd %s251, 0
          %s257 = smul.addr %s30, 4
          %s258 = sadd.s32 %s32, %s257
          %s259 = smul.addr %s258, 4
          %s260 = scalar_lea.hbm %s1, %s259
          %s262 = sshll.u32 %s260, 4
          %s263 = int_to_ptr.hbm [resolvable:$true] %s262
          %s264 = sshll.u32 %s254, 4
          %s265 = int_to_ptr.vmem [resolvable:$true] %s264
          %267 = dma.hbm_to_vmem [thread:$0]  %s263, 64, %s265, %s251
        $region28: #{tpu_custom_call.1} parent=19 // pred_fallthru
          _
        // Predicated region
        $region29: #{tpu_custom_call.1} parent=19 // pred_check
          %p268 = pneg %p122
        $region30: #{tpu_custom_call.1} parent=19 // pred_check_branch
          %270 = sbr.rel (%p268) target = $region32
        $region31: #{tpu_custom_call.1} parent=19 // pred_region
          %s271 = sand.u32 %s23, 1
          %s272 = scalar_lea.sflag [#allocation7], %s271
          %s273 = sand.u32 %s112, 1
          %s274 = smul.addr %s273, 4
          %s275 = scalar_lea.vmem [#allocation8], %s274
          %277 = vsyncadd %s272, 0
          %s278 = smul.addr %s30, 4
          %s279 = sadd.s32 %s32, %s278
          %s280 = smul.addr %s279, 4
          %s281 = scalar_lea.hbm %s2, %s280
          %s283 = sshll.u32 %s281, 4
          %s284 = int_to_ptr.hbm [resolvable:$true] %s283
          %s285 = sshll.u32 %s275, 4
          %s286 = int_to_ptr.vmem [resolvable:$true] %s285
          %288 = dma.hbm_to_vmem [thread:$0]  %s284, 64, %s286, %s272
        $region32: #{tpu_custom_call.1} parent=19 // pred_fallthru
          _
        // Predicated region
        $region33: #{tpu_custom_call.1} parent=19 // pred_check
          %p289 = pneg %p148
        $region34: #{tpu_custom_call.1} parent=19 // pred_check_branch
          %291 = sbr.rel (%p289) target = $region36
        $region35: #{tpu_custom_call.1} parent=19 // pred_region
          %s292 = sand.u32 %s138, 1
          %s293 = scalar_lea.sflag [#allocation10], %s292
          %s294 = sand.u32 %s138, 1
          %s295 = smul.addr %s294, 4
          %s296 = scalar_lea.vmem [#allocation9], %s295
          %298 = vsyncadd %s293, 0
          %s299 = smul.addr %s32, 4
          %s300 = scalar_lea.hbm %s3, %s299
          %s302 = sshll.u32 %s300, 4
          %s303 = int_to_ptr.hbm [resolvable:$true] %s302
          %s304 = sshll.u32 %s296, 4
          %s305 = int_to_ptr.vmem [resolvable:$true] %s304
          %307 = dma.hbm_to_vmem [thread:$0]  %s303, 64, %s305, %s293
        $region36: #{tpu_custom_call.1} parent=19 // pred_fallthru
          _
      $region20: #{tpu_custom_call.1} parent=5 // pred_fallthru
        _
      %p308 = scmp.le.s32.totalorder 1, %s23
      %p309 = scmp.lt.s32.totalorder %s23, 9
      %p310 = pnand %p308, %p309
      %p311 = pneg %p310
      // Predicated region
      $region37: #{tpu_custom_call.1} parent=5 // pred_check
        _
      $region38: #{tpu_custom_call.1} parent=5 // pred_check_branch
        %313 = sbr.rel (%p310) target = $region40
      $region39: #{tpu_custom_call.1} parent=5 // pred_region
        %s314 = ssub.s32 %s23, 1
        %s315 = sand.u32 %s59, 1
        %s316 = scalar_lea.sflag [#allocation4], %s315
        %s317 = sand.u32 %s59, 1
        %s318 = smul.addr %s317, 4
        %s319 = scalar_lea.vmem [#allocation3], %s318
        // Predicated region
        $region41: #{tpu_custom_call.1} parent=39 // pred_check
          %p320 = pneg %p72
        $region42: #{tpu_custom_call.1} parent=39 // pred_check_branch
          %322 = sbr.rel (%p320) target = $region44
        $region43: #{tpu_custom_call.1} parent=39 // pred_region
          %324 = dma.done %s316, 64
        $region44: #{tpu_custom_call.1} parent=39 // pred_fallthru
          _
        %s325 = sand.u32 %s28, 1
        %s326 = scalar_lea.sflag [#allocation7], %s325
        %s327 = sand.u32 %s87, 1
        %s328 = smul.addr %s327, 4
        %s329 = scalar_lea.vmem [#allocation6], %s328
        // Predicated region
        $region45: #{tpu_custom_call.1} parent=39 // pred_check
          %p330 = pneg %p100
        $region46: #{tpu_custom_call.1} parent=39 // pred_check_branch
          %332 = sbr.rel (%p330) target = $region48
        $region47: #{tpu_custom_call.1} parent=39 // pred_region
          %334 = dma.done %s326, 64
        $region48: #{tpu_custom_call.1} parent=39 // pred_fallthru
          _
        %s335 = sand.u32 %s28, 1
        %s336 = scalar_lea.sflag [#allocation7], %s335
        %s337 = sand.u32 %s115, 1
        %s338 = smul.addr %s337, 4
        %s339 = scalar_lea.vmem [#allocation8], %s338
        // Predicated region
        $region49: #{tpu_custom_call.1} parent=39 // pred_check
          %p340 = pneg %p128
        $region50: #{tpu_custom_call.1} parent=39 // pred_check_branch
          %342 = sbr.rel (%p340) target = $region52
        $region51: #{tpu_custom_call.1} parent=39 // pred_region
          %344 = dma.done %s336, 64
        $region52: #{tpu_custom_call.1} parent=39 // pred_fallthru
          _
        %s345 = sand.u32 %s141, 1
        %s346 = scalar_lea.sflag [#allocation10], %s345
        %s347 = sand.u32 %s141, 1
        %s348 = smul.addr %s347, 4
        %s349 = scalar_lea.vmem [#allocation9], %s348
        // Predicated region
        $region53: #{tpu_custom_call.1} parent=39 // pred_check
          %p350 = pneg %p154
        $region54: #{tpu_custom_call.1} parent=39 // pred_check_branch
          %352 = sbr.rel (%p350) target = $region56
        $region55: #{tpu_custom_call.1} parent=39 // pred_region
          %354 = dma.done %s346, 64
        $region56: #{tpu_custom_call.1} parent=39 // pred_fallthru
          _
        %s355 = sand.u32 %s59, 1
        %s356 = scalar_lea.sflag [#allocation4], %s355
        %s357 = sand.u32 %s59, 1
        %s358 = smul.addr %s357, 4
        %s359 = scalar_lea.vmem [#allocation3], %s358
        %p360 = pneg %p72
        %p361 = pneg %p69
        %s362 = sand.u32 %s28, 1
        %s363 = scalar_lea.sflag [#allocation7], %s362
        %s364 = sand.u32 %s87, 1
        %s365 = smul.addr %s364, 4
        %s366 = scalar_lea.vmem [#allocation6], %s365
        %p367 = pneg %p100
        %p368 = pneg %p97
        %s369 = sand.u32 %s28, 1
        %s370 = scalar_lea.sflag [#allocation7], %s369
        %s371 = sand.u32 %s115, 1
        %s372 = smul.addr %s371, 4
        %s373 = scalar_lea.vmem [#allocation8], %s372
        %p374 = pneg %p128
        %p375 = pneg %p125
        %s376 = sand.u32 %s141, 1
        %s377 = scalar_lea.sflag [#allocation10], %s376
        %s378 = sand.u32 %s141, 1
        %s379 = smul.addr %s378, 4
        %s380 = scalar_lea.vmem [#allocation9], %s379
        %p381 = pneg %p154
        %p382 = pneg %p151
        %p383 = pneg %p175
        %p384 = pneg %p172
        %p385 = pneg %p203
        %p386 = pneg %p200
        %s387 = sand.u32 %s190, 1
        %s388 = scalar_lea.sflag [#allocation5], %s387
        %s389 = sand.u32 %s190, 1
        %s390 = smul.addr %s389, 8
        %s391 = scalar_lea.vmem [#allocation11], %s390
        %p393 = scmp.eq.s32.totalorder %s35, 0
        // Predicated region
        $region57: #{tpu_custom_call.1} parent=39 // pred_check
          %p394 = pneg %p393
        $region58: #{tpu_custom_call.1} parent=39 // pred_check_branch
          %396 = sbr.rel (%p394) target = $region60
        $region59: #{tpu_custom_call.1} parent=39 // pred_region
          %vm397 = vcmask 261120
          %398 = vst.msk [vmem:[#allocation2] sm:$0xff] %vm397, 0.0
        $region60: #{tpu_custom_call.1} parent=39 // pred_fallthru
          _
        %v399 = vld [vmem:[%s319] sm:$0xf]
        %v400 = vld [vmem:[%s329] sm:$0xf]
        %v401 = vld [vmem:[%s339] sm:$0xf]
        %vm402 = vcmask 64512
        %v404 = vsel %vm402, %v399, 0
        %v407 = vsel %vm402, %v400, 0
        %409 = vmatpush.bf16.xpose.msra.mxu0 0
        %410 = vmatpush.bf16.xpose.msra.mxu0 0
        %411 = vmatpush.bf16.xpose.msra.mxu0 0
        %412 = vmatpush.bf16.xpose.msra.mxu0 0
        %413 = vmatpush.bf16.xpose.msra.mxu0 0
        %414 = vmatpush.bf16.xpose.msra.mxu0 0
        %415 = vmatpush.bf16.xpose.msra.mxu0 0
        %416 = vmatpush.bf16.xpose.msra.mxu0 %v407
        %417 = vmatmul.bf16.gmra.mxu0 %v404
        %v418 = vpop.f32.mrf.mxu0
        %v419 = vadd.f32 0.0, %v418
        %v420 = vpop.f32.mrf.mxu0
        %421 = vdwg.mxu0
        %v422 = vsel %vm402, %v419, -inf
        %423 = vmax.xlane.f32.xlu0 %v422
        %v424 = vpop.xlane.xlu0 %423
        %v425 = vsub.f32 %v419, %v424
        %v426 = vmul.f32 %v425, 1.442695
        %v427 = vpow.pop %v426
        %v428 = vsel %vm402, %v427, 0.0
        %429 = vadd.xlane.f32.xlu0 %v428
        %v430 = vpop.xlane.xlu0 %429
        %v431 = vrcp.pop %v430
        %v432 = vpack.c.bf16 %v427, %v427
        %v434 = vsel %vm402, %v432, 0
        %vm436 = vcmask 1043456
        %v438 = vsel %vm436, %v401, 0
        %440 = vmatpush.bf16.msra.mxu0 0
        %441 = vmatpush.bf16.msra.mxu0 0
        %442 = vmatpush.bf16.msra.mxu0 0
        %443 = vmatpush.bf16.msra.mxu0 0
        %444 = vmatpush.bf16.msra.mxu0 0
        %445 = vmatpush.bf16.msra.mxu0 0
        %446 = vmatpush.bf16.msra.mxu0 0
        %447 = vmatpush.bf16.msra.mxu0 %v438
        %448 = vmatmul.bf16.gmra.mxu0 %v434
        %v449 = vpop.f32.mrf.mxu0
        %v450 = vadd.f32 0.0, %v449
        %v451 = vpop.f32.mrf.mxu0
        %452 = vdwg.mxu0
        %v453 = vmul.f32 %v450, %v431
        %v454 = vld [vmem:[#allocation2] sm:$0xff]
        %v455 = vpack.c.bf16 %v453, %v453
        %v456 = vld [vmem:[%s349] sm:$0xf]
        %v458 = vsel %vm402, %v455, 0
        %v461 = vsel %vm436, %v456, 0
        %463 = vmatpush.bf16.msra.mxu0 0
        %464 = vmatpush.bf16.msra.mxu0 0
        %465 = vmatpush.bf16.msra.mxu0 0
        %466 = vmatpush.bf16.msra.mxu0 0
        %467 = vmatpush.bf16.msra.mxu0 0
        %468 = vmatpush.bf16.msra.mxu0 0
        %469 = vmatpush.bf16.msra.mxu0 0
        %470 = vmatpush.bf16.msra.mxu0 %v461
        %471 = vmatmul.bf16.gmra.mxu0 %v458
        %v472 = vpop.f32.mrf.mxu0
        %v473 = vadd.f32 0.0, %v472
        %v474 = vpop.f32.mrf.mxu0
        %475 = vdwg.mxu0
        %v476 = vadd.f32 %v454, %v473
        %vm477 = vcmask 261120
        %478 = vst.msk [vmem:[#allocation2] sm:$0xff] %vm477, %v476
        %p479 = scmp.eq.s32.totalorder %s35, 3
        // Predicated region
        $region61: #{tpu_custom_call.1} parent=39 // pred_check
          %p480 = pneg %p479
        $region62: #{tpu_custom_call.1} parent=39 // pred_check_branch
          %482 = sbr.rel (%p480) target = $region64
        $region63: #{tpu_custom_call.1} parent=39 // pred_region
          %v483 = vld [vmem:[#allocation2] sm:$0xff]
          %v484 = vld [vmem:[%s4] sm:$0x1]
          %v486 = vperm.slane %v484, 0
          %v488 = vadd.f32 %v483, %v486
          %489 = vst.msk [vmem:[%s391] sm:$0xff] %vm477, %v488
        $region64: #{tpu_custom_call.1} parent=39 // pred_fallthru
          _
        %s490 = sand.u32 %s190, 1
        %s491 = scalar_lea.sflag [#allocation5], %s490
        %s492 = sand.u32 %s190, 1
        %s493 = smul.addr %s492, 8
        %s494 = scalar_lea.vmem [#allocation11], %s493
        // Predicated region
        $region65: #{tpu_custom_call.1} parent=39 // pred_check
          %p495 = pneg %p200
        $region66: #{tpu_custom_call.1} parent=39 // pred_check_branch
          %497 = sbr.rel (%p495) target = $region68
        $region67: #{tpu_custom_call.1} parent=39 // pred_region
          %499 = vsyncadd %s491, 0
          %s500 = sadd.s32 %s34, %s33
          %s501 = smul.addr %s500, 8
          %s502 = scalar_lea.hbm %s5, %s501
          %s504 = sshll.u32 %s494, 4
          %s505 = int_to_ptr.vmem [resolvable:$true] %s504
          %s506 = sshll.u32 %s502, 4
          %s507 = int_to_ptr.hbm [resolvable:$true] %s506
          %509 = dma.vmem_to_hbm [thread:$0]  %s505, 128, %s507, %s491
        $region68: #{tpu_custom_call.1} parent=39 // pred_fallthru
          _
      $region40: #{tpu_custom_call.1} parent=5 // pred_fallthru
        _
      %p510 = scmp.le.s32.totalorder 2, %s23
      // Predicated region
      $region69: #{tpu_custom_call.1} parent=5 // pred_check
        %p511 = pneg %p510
      $region70: #{tpu_custom_call.1} parent=5 // pred_check_branch
        %513 = sbr.rel (%p511) target = $region72
      $region71: #{tpu_custom_call.1} parent=5 // pred_region
        %s514 = ssub.s32 %s23, 2
        // Predicated region
        $region73: #{tpu_custom_call.1} parent=71 // pred_check
          %p515 = pneg %p206
        $region74: #{tpu_custom_call.1} parent=71 // pred_check_branch
          %517 = sbr.rel (%p515) target = $region76
        $region75: #{tpu_custom_call.1} parent=71 // pred_region
          %s518 = sand.u32 %s191, 1
          %s519 = scalar_lea.sflag [#allocation5], %s518
          %s520 = sand.u32 %s191, 1
          %s521 = smul.addr %s520, 8
          %s522 = scalar_lea.vmem [#allocation11], %s521
          %524 = dma.done %s519, 128
        $region76: #{tpu_custom_call.1} parent=71 // pred_fallthru
          _
      $region72: #{tpu_custom_call.1} parent=5 // pred_fallthru
        _
    $region6: #{tpu_custom_call.1} parent=1 // loop_footer
      %s27 = sadd.s32 1, %s23
    $region7: #{tpu_custom_call.1} parent=1 // loop_footer_branch
      %22 = sbr.rel target = $region3
    $region8: #{tpu_custom_call.1} parent=1 // loop_exit
      _
    %525 = vsyncpa [#allocation4], 1
    %s526 = scalar_lea.sflag [#allocation4], 1
    %527 = vsyncpa %s526, 1
    %528 = vsyncpa [#allocation7], 1
    %s529 = scalar_lea.sflag [#allocation7], 1
    %530 = vsyncpa %s529, 1
    %531 = vsyncpa [#allocation10], 1
    %s532 = scalar_lea.sflag [#allocation10], 1
    %533 = vsyncpa %s532, 1
    %534 = vsyncpa [#allocation5], 1
    %s535 = scalar_lea.sflag [#allocation5], 1
    %536 = vsyncpa %s535, 1

</llo_original>
